<compile_context>
chip_gen: v5e
topology: v5e:2x2
jax: 0.10.0
libtpu: 0.0.40
codegen_flags: <defaults>
</compile_context>

<pallas_src>
import functools

import jax
import jax.numpy as jnp
from jax.experimental import pallas as pl
from jax.experimental.pallas import tpu as pltpu


def _round_up(x, m):
    return ((x + m - 1) // m) * m


def _decoder_kernel(x_ref, *refs, num_hidden, window, maxout):
    """Fused MLP forward on one batch tile. refs = (param refs..., out_ref)."""
    out_ref = refs[-1]
    params = refs[:-1]

    h = x_ref[...].astype(jnp.float32)                      # (TB, D_pad)

    # num_hidden is a small static int -> unrolled; shapes differ per layer.
    for k in range(num_hidden):
        w = params[2 * k][...]                              # (in_f, out_f)
        b = params[2 * k + 1][...]                          # (1, out_f)
        z = jnp.dot(h, w, preferred_element_type=jnp.float32) + b
        if maxout:
            # Columns were de-interleaved in the wrapper as j*groups + g, so
            # torch's MaxPool1d(k=window, s=window) over contiguous columns is
            # an elementwise max of `window` contiguous lane slices here
            # (one MXU pass per layer; slices/maxes go to XLU/VPU slack).
            groups = z.shape[1] // window
            acc = z[:, :groups]
            for j in range(1, window):
                acc = jnp.maximum(acc, z[:, j * groups:(j + 1) * groups])
            h = acc                                         # (TB, groups)
        else:                                               # ReLU path
            h = jnp.maximum(z, 0.0)

    wf = params[-2][...]                                    # (in_last, out_pad)
    bf = params[-1][...]                                    # (1, out_pad)
    logits = jnp.dot(h, wf, preferred_element_type=jnp.float32) + bf
    denom = 1.0 + jnp.exp(-logits)                          # EUP exp
    y = pl.reciprocal(denom, approx=True)                   # EUP rcp (approx)
    out_ref[...] = y.astype(out_ref.dtype)


def decoder_forward(x, weights, biases, *, non_linearity="MaxOut",
                    maxout_window_size=4, batch_tile=None):
    """Decoder.forward.  weights[k]: (out_f, in_f) torch layout, biases[k]: (out_f,)."""
    assert non_linearity in ("MaxOut", "ReLU")
    B, D = x.shape
    n_hidden = len(weights) - 1
    out_dim = weights[-1].shape[0]
    window = maxout_window_size
    maxout = non_linearity == "MaxOut"

    # ---- hoist all batch-independent parameter packing out of the kernel ----
    packed = []
    for k in range(n_hidden):
        W = weights[k].astype(jnp.float32)                  # (out_f, in_f)
        b = biases[k].astype(jnp.float32)                   # (out_f,)
        if maxout:
            out_f, in_f = W.shape
            groups = out_f // window
            # De-interleave: new column j*groups+g = torch column g*window+j
            # -> a single lane-dense matmul per maxout layer in the kernel.
            w_p = W.T.reshape(in_f, groups, window).transpose(0, 2, 1)
            w_p = w_p.reshape(in_f, out_f)
            b_p = b.reshape(groups, window).T.reshape(1, out_f)
            packed += [w_p, b_p]
        else:
            packed += [W.T, b.reshape(1, -1)]

    # Final layer: zero-pad output columns to a full 128-lane width so the
    # writeback is unmasked / lane-dense (padded columns sliced off after).
    out_pad = _round_up(out_dim, 128)
    wf = weights[-1].astype(jnp.float32).T                  # (in_last, out_dim)
    bf = biases[-1].astype(jnp.float32).reshape(1, -1)
    if out_pad != out_dim:
        wf = jnp.pad(wf, ((0, 0), (0, out_pad - out_dim)))
        bf = jnp.pad(bf, ((0, 0), (0, out_pad - out_dim)))
    packed += [wf, bf]

    # Zero-pad the input-feature (contraction) dim of x and of the first
    # weight to a lane multiple: unmasked loads, MXU pads K internally anyway.
    D_pad = _round_up(D, 128)
    if D_pad != D:
        x = jnp.pad(x, ((0, 0), (0, D_pad - D)))
        packed[0] = jnp.pad(packed[0], ((0, D_pad - D), (0, 0)))

    # ---- batch tiling: large tiles amortize the ~0.35us per-step overhead,
    # but keep >= 2 grid steps when possible so the "parallel" axis can be
    # sharded across both v7x TensorCores; avoid padding B to a full 512. ----
    if batch_tile is None:
        n_tiles = max(2, pl.cdiv(B, 512))
        batch_tile = _round_up(pl.cdiv(B, n_tiles), 8)
    tb = batch_tile
    B_pad = _round_up(B, tb)
    x_p = jnp.pad(x, ((0, B_pad - B), (0, 0))) if B_pad != B else x

    grid = (B_pad // tb,)
    in_specs = [pl.BlockSpec((tb, D_pad), lambda i: (i, 0))]
    for p in packed:  # full-extent blocks, constant index -> resident in VMEM
        in_specs.append(pl.BlockSpec(p.shape, lambda i, z=(0,) * p.ndim: z))

    # Explicit VMEM budget: resident params + double-buffered I/O + headroom.
    param_bytes = sum(int(p.size) * p.dtype.itemsize for p in packed)
    io_bytes = 4 * tb * (D_pad + out_pad)
    vmem_limit = min(int(2 * (param_bytes + io_bytes)) + (8 << 20), 100 << 20)

    kernel = functools.partial(
        _decoder_kernel, num_hidden=n_hidden, window=window, maxout=maxout)

    y = pl.pallas_call(
        kernel,
        out_shape=jax.ShapeDtypeStruct((B_pad, out_pad), x.dtype),
        grid=grid,
        in_specs=in_specs,
        out_specs=pl.BlockSpec((tb, out_pad), lambda i: (i, 0)),
        compiler_params=pltpu.CompilerParams(
            dimension_semantics=("parallel",),
            vmem_limit_bytes=vmem_limit),
    )(x_p, *packed)

    return y[:B, :out_dim]


# ----------------------------- reference & test -----------------------------

def _reference_decoder(x, weights, biases, non_linearity, window):
    hp = jax.lax.Precision.HIGHEST
    h = x
    for k in range(len(weights) - 1):
        h = jnp.dot(h, weights[k].T, precision=hp) + biases[k]
        if non_linearity == "MaxOut":
            Bh, F = h.shape
            h = jnp.max(h.reshape(Bh, F // window, window), axis=-1)
        else:
            h = jnp.maximum(h, 0.0)
    h = jnp.dot(h, weights[-1].T, precision=hp) + biases[-1]
    return jax.nn.sigmoid(h)


def _init_decoder_params(key, dim_input, hidden_dims, out_dim, non_linearity, window):
    """Replicates the layer-dimension logic of the torch Decoder.__init__."""
    dims = [dim_input] + list(hidden_dims)
    shapes = []
    if non_linearity == "MaxOut":
        in_f = dims[0]
        for i in range(len(dims) - 1):
            shapes.append((dims[i + 1], in_f))
            in_f = dims[i + 1] // window
        shapes.append((out_dim, in_f))
    else:
        for i in range(len(dims) - 1):
            shapes.append((dims[i + 1], dims[i]))
        shapes.append((out_dim, dims[-1]))

    weights, biases = [], []
    keys = jax.random.split(key, 2 * len(shapes))
    for i, (of, inf) in enumerate(shapes):
        scale = inf ** -0.5
        weights.append(scale * jax.random.normal(keys[2 * i], (of, inf), jnp.float32))
        biases.append(scale * jax.random.normal(keys[2 * i + 1], (of,), jnp.float32))
    return weights, biases


if __name__ == "__main__":
    # Decoder(dim_input=32, out_dim=16, hidden_dims=[128, 64], binary=True,
    #         non_linearity='MaxOut', maxout_window_size=4)
    batch = 64
    dim_input = 32
    hidden_dims = [128, 64]
    out_dim = 16
    window = 4

    key = jax.random.PRNGKey(0)
    k_x, k_p = jax.random.split(key)
    x = jax.random.normal(k_x, (batch, dim_input), dtype=jnp.float32)

    for non_linearity in ("MaxOut", "ReLU"):
        weights, biases = _init_decoder_params(
            k_p, dim_input, hidden_dims, out_dim, non_linearity, window)

        y = decoder_forward(x, weights, biases,
                            non_linearity=non_linearity,
                            maxout_window_size=window)
        y = jax.block_until_ready(y)

        y_ref = _reference_decoder(x, weights, biases, non_linearity, window)
        assert y.shape == (batch, out_dim)
        # Tolerance slightly loosened vs f32-exact to allow the EUP
        # approximate reciprocal used for the sigmoid (outputs are in [0,1]).
        assert jnp.allclose(y, y_ref, atol=2e-3, rtol=2e-3), (
            f"{non_linearity}: max err {jnp.max(jnp.abs(y - y_ref))}")

    print("KERNEL_OK")
</pallas_src>

<mosaic_0001>
module attributes {stable_mosaic.version = 11 : i64} {
  func.func @_decoder_kernel(%arg0: i32, %arg1: memref<32x128xf32, #tpu.memory_space<vmem>>, %arg2: memref<128x128xf32, #tpu.memory_space<vmem>>, %arg3: memref<1x128xf32, #tpu.memory_space<vmem>>, %arg4: memref<32x64xf32, #tpu.memory_space<vmem>>, %arg5: memref<1x64xf32, #tpu.memory_space<vmem>>, %arg6: memref<16x128xf32, #tpu.memory_space<vmem>>, %arg7: memref<1x128xf32, #tpu.memory_space<vmem>>, %arg8: memref<32x128xf32, #tpu.memory_space<vmem>>) attributes {dimension_semantics = [#tpu.dimension_semantics<parallel>], iteration_bounds = array<i64: 2>, scalar_prefetch = 0 : i64, scratch_operands = 0 : i64, tpu.core_type = #tpu.core_type<tc>, window_params = [{transform_indices = @transform_0, window_bounds = array<i64: 32, 128>}, {pipeline_mode = #tpu.pipeline_mode<synchronous>, transform_indices = @transform_1, window_bounds = array<i64: 128, 128>}, {pipeline_mode = #tpu.pipeline_mode<synchronous>, transform_indices = @transform_2, window_bounds = array<i64: 1, 128>}, {pipeline_mode = #tpu.pipeline_mode<synchronous>, transform_indices = @transform_3, window_bounds = array<i64: 32, 64>}, {pipeline_mode = #tpu.pipeline_mode<synchronous>, transform_indices = @transform_4, window_bounds = array<i64: 1, 64>}, {pipeline_mode = #tpu.pipeline_mode<synchronous>, transform_indices = @transform_5, window_bounds = array<i64: 16, 128>}, {pipeline_mode = #tpu.pipeline_mode<synchronous>, transform_indices = @transform_6, window_bounds = array<i64: 1, 128>}, {transform_indices = @transform_7, window_bounds = array<i64: 32, 128>}]} {
    %c0 = arith.constant 0 : index
    %c0_0 = arith.constant 0 : index
    %0 = vector.load %arg1[%c0, %c0_0] : memref<32x128xf32, #tpu.memory_space<vmem>>, vector<32x128xf32>
    %c0_1 = arith.constant 0 : index
    %c0_2 = arith.constant 0 : index
    %1 = vector.load %arg2[%c0_1, %c0_2] : memref<128x128xf32, #tpu.memory_space<vmem>>, vector<128x128xf32>
    %c0_3 = arith.constant 0 : index
    %c0_4 = arith.constant 0 : index
    %2 = vector.load %arg3[%c0_3, %c0_4] : memref<1x128xf32, #tpu.memory_space<vmem>>, vector<1x128xf32>
    %cst = arith.constant dense<0.000000e+00> : vector<32x128xf32>
    %3 = tpu.matmul %0, %1, %cst {dimension_numbers = #tpu.dot_dimension_numbers<[1], [0], [0], [1], [0, 0, 1, 1], [], []>} : vector<32x128xf32>, vector<128x128xf32>, vector<32x128xf32> -> vector<32x128xf32>
    %4 = vector.broadcast %2 : vector<1x128xf32> to vector<32x128xf32>
    %5 = arith.addf %3, %4 : vector<32x128xf32>
    %6 = vector.extract_strided_slice %5 {offsets = [0, 0], sizes = [32, 32], strides = [1, 1]} : vector<32x128xf32> to vector<32x32xf32>
    %7 = vector.extract_strided_slice %5 {offsets = [0, 32], sizes = [32, 32], strides = [1, 1]} : vector<32x128xf32> to vector<32x32xf32>
    %8 = arith.maximumf %6, %7 : vector<32x32xf32>
    %9 = vector.extract_strided_slice %5 {offsets = [0, 64], sizes = [32, 32], strides = [1, 1]} : vector<32x128xf32> to vector<32x32xf32>
    %10 = arith.maximumf %8, %9 : vector<32x32xf32>
    %11 = vector.extract_strided_slice %5 {offsets = [0, 96], sizes = [32, 32], strides = [1, 1]} : vector<32x128xf32> to vector<32x32xf32>
    %12 = arith.maximumf %10, %11 : vector<32x32xf32>
    %c0_5 = arith.constant 0 : index
    %c0_6 = arith.constant 0 : index
    %13 = vector.load %arg4[%c0_5, %c0_6] : memref<32x64xf32, #tpu.memory_space<vmem>>, vector<32x64xf32>
    %c0_7 = arith.constant 0 : index
    %c0_8 = arith.constant 0 : index
    %14 = vector.load %arg5[%c0_7, %c0_8] : memref<1x64xf32, #tpu.memory_space<vmem>>, vector<1x64xf32>
    %cst_9 = arith.constant dense<0.000000e+00> : vector<32x64xf32>
    %15 = tpu.matmul %12, %13, %cst_9 {dimension_numbers = #tpu.dot_dimension_numbers<[1], [0], [0], [1], [0, 0, 1, 1], [], []>} : vector<32x32xf32>, vector<32x64xf32>, vector<32x64xf32> -> vector<32x64xf32>
    %16 = vector.broadcast %14 : vector<1x64xf32> to vector<32x64xf32>
    %17 = arith.addf %15, %16 : vector<32x64xf32>
    %18 = vector.extract_strided_slice %17 {offsets = [0, 0], sizes = [32, 16], strides = [1, 1]} : vector<32x64xf32> to vector<32x16xf32>
    %19 = vector.extract_strided_slice %17 {offsets = [0, 16], sizes = [32, 16], strides = [1, 1]} : vector<32x64xf32> to vector<32x16xf32>
    %20 = arith.maximumf %18, %19 : vector<32x16xf32>
    %21 = vector.extract_strided_slice %17 {offsets = [0, 32], sizes = [32, 16], strides = [1, 1]} : vector<32x64xf32> to vector<32x16xf32>
    %22 = arith.maximumf %20, %21 : vector<32x16xf32>
    %23 = vector.extract_strided_slice %17 {offsets = [0, 48], sizes = [32, 16], strides = [1, 1]} : vector<32x64xf32> to vector<32x16xf32>
    %24 = arith.maximumf %22, %23 : vector<32x16xf32>
    %c0_10 = arith.constant 0 : index
    %c0_11 = arith.constant 0 : index
    %25 = vector.load %arg6[%c0_10, %c0_11] : memref<16x128xf32, #tpu.memory_space<vmem>>, vector<16x128xf32>
    %c0_12 = arith.constant 0 : index
    %c0_13 = arith.constant 0 : index
    %26 = vector.load %arg7[%c0_12, %c0_13] : memref<1x128xf32, #tpu.memory_space<vmem>>, vector<1x128xf32>
    %cst_14 = arith.constant dense<0.000000e+00> : vector<32x128xf32>
    %27 = tpu.matmul %24, %25, %cst_14 {dimension_numbers = #tpu.dot_dimension_numbers<[1], [0], [0], [1], [0, 0, 1, 1], [], []>} : vector<32x16xf32>, vector<16x128xf32>, vector<32x128xf32> -> vector<32x128xf32>
    %28 = vector.broadcast %26 : vector<1x128xf32> to vector<32x128xf32>
    %29 = arith.addf %27, %28 : vector<32x128xf32>
    %cst_15 = arith.constant 0.000000e+00 : f32
    %30 = vector.broadcast %cst_15 : f32 to vector<32x128xf32>
    %31 = arith.subf %30, %29 : vector<32x128xf32>
    %32 = math.exp %31 : vector<32x128xf32>
    %cst_16 = arith.constant 1.000000e+00 : f32
    %33 = vector.broadcast %cst_16 : f32 to vector<32x128xf32>
    %34 = arith.addf %33, %32 : vector<32x128xf32>
    %35 = tpu.reciprocal %34 {approx = true} : vector<32x128xf32> -> vector<32x128xf32>
    %c0_17 = arith.constant 0 : index
    %c0_18 = arith.constant 0 : index
    %36 = vector.load %arg8[%c0_17, %c0_18] : memref<32x128xf32, #tpu.memory_space<vmem>>, vector<32x128xf32>
    tpu.vector_store %arg8[%c0_17, %c0_18], %35 {strides = array<i32>} : memref<32x128xf32, #tpu.memory_space<vmem>>, vector<32x128xf32>,
    return
  }
  func.func @transform_0(%arg0: i32) -> (i32, i32) {
    %c0_i32 = arith.constant 0 : i32
    %c0_i32_0 = arith.constant 0 : i32
    return %arg0, %c0_i32 : i32, i32
  }
  func.func @transform_1(%arg0: i32) -> (i32, i32) {
    %c0_i32 = arith.constant 0 : i32
    %c0_i32_0 = arith.constant 0 : i32
    %c0_i32_1 = arith.constant 0 : i32
    return %c0_i32, %c0_i32_0 : i32, i32
  }
  func.func @transform_2(%arg0: i32) -> (i32, i32) {
    %c0_i32 = arith.constant 0 : i32
    %c0_i32_0 = arith.constant 0 : i32
    %c0_i32_1 = arith.constant 0 : i32
    return %c0_i32, %c0_i32_0 : i32, i32
  }
  func.func @transform_3(%arg0: i32) -> (i32, i32) {
    %c0_i32 = arith.constant 0 : i32
    %c0_i32_0 = arith.constant 0 : i32
    %c0_i32_1 = arith.constant 0 : i32
    return %c0_i32, %c0_i32_0 : i32, i32
  }
  func.func @transform_4(%arg0: i32) -> (i32, i32) {
    %c0_i32 = arith.constant 0 : i32
    %c0_i32_0 = arith.constant 0 : i32
    %c0_i32_1 = arith.constant 0 : i32
    return %c0_i32, %c0_i32_0 : i32, i32
  }
  func.func @transform_5(%arg0: i32) -> (i32, i32) {
    %c0_i32 = arith.constant 0 : i32
    %c0_i32_0 = arith.constant 0 : i32
    %c0_i32_1 = arith.constant 0 : i32
    return %c0_i32, %c0_i32_0 : i32, i32
  }
  func.func @transform_6(%arg0: i32) -> (i32, i32) {
    %c0_i32 = arith.constant 0 : i32
    %c0_i32_0 = arith.constant 0 : i32
    %c0_i32_1 = arith.constant 0 : i32
    return %c0_i32, %c0_i32_0 : i32, i32
  }
  func.func @transform_7(%arg0: i32) -> (i32, i32) {
    %c0_i32 = arith.constant 0 : i32
    %c0_i32_0 = arith.constant 0 : i32
    return %arg0, %c0_i32 : i32, i32
  }
}

</mosaic_0001>

<llo_original>
// kernel: tpu_custom_call.1
$region0: #{tpu_custom_call.1}
  #allocation0 [shape = 'u32[]', space=smem, size = 0x4, offset = 0x4, fixed_abs, tag = 'smem constant byte address 0x4 - core index']
  #allocation1 [shape = 'u32[72,128]{1,0:T(1,128)}', space=vmem, size = 0x9000, scoped, tag = 'internal scratch']
  %s0 = inlined_call_operand.hbm [shape: f32[64,128], index: 0, kind: input, shape index: {}]
  %s1 = inlined_call_operand.hbm [shape: f32[128,128], index: 1, kind: input, shape index: {}]
  %s2 = inlined_call_operand.vmem [shape: f32[1,128], index: 2, kind: input, shape index: {}]
  %s3 = inlined_call_operand.hbm [shape: f32[32,64], index: 3, kind: input, shape index: {}]
  %s4 = inlined_call_operand.vmem [shape: f32[1,64], index: 4, kind: input, shape index: {}]
  %s5 = inlined_call_operand.hbm [shape: f32[16,128], index: 5, kind: input, shape index: {}]
  %s6 = inlined_call_operand.vmem [shape: f32[1,128], index: 6, kind: input, shape index: {}]
  %s7 = inlined_call_operand.hbm [shape: f32[64,128], index: 7, kind: output, shape index: {}]
  %s8 = sld [smem:[#allocation0]]
  $region77: #{tpu_custom_call.1} parent=0
    _
  %s10 = ssub.s32 1, %s8
  %s11 = scalar_select 0, %s10, %s8
  $region1: #{tpu_custom_call.1} parent=0
    #allocation2 [shape = 'u8[32768]{0}', space=vmem, size = 0x8000, scoped, tag = 'input window, operand 0']
    #allocation3 [shape = 's32[2]{0}', space=sflag, size = 0x8, scoped, tag = 'scoped memory for tpu_custom_call.1']
    #allocation4 [shape = 's32[2]{0}', space=sflag, size = 0x8, scoped, tag = 'scoped memory for tpu_custom_call.1']
    #allocation5 [shape = 'u8[65536]{0}', space=vmem, size = 0x10000, scoped, tag = 'input window, operand 1, single buffered']
    #allocation6 [shape = 's32[1]{0}', space=sflag, size = 0x4, scoped, tag = 'scoped memory for tpu_custom_call.1']
    #allocation7 [shape = 'u8[16384]{0}', space=vmem, size = 0x4000, scoped, tag = 'input window, operand 3, single buffered']
    #allocation8 [shape = 'u8[8192]{0}', space=vmem, size = 0x2000, scoped, tag = 'input window, operand 5, single buffered']
    #allocation9 [shape = 's32[1]{0}', space=sflag, size = 0x4, scoped, tag = 'scoped memory for tpu_custom_call.1']
    #allocation10 [shape = 'u8[32768]{0}', space=vmem, size = 0x8000, scoped, tag = 'output window, operand 0']
    %12 = vsyncpa [#allocation3], 0
    %s13 = scalar_lea.sflag [#allocation3], 1
    %14 = vsyncpa %s13, 0
    %15 = vsyncpa [#allocation6], 0
    %16 = vsyncpa [#allocation9], 0
    %17 = vsyncpa [#allocation4], 0
    %s18 = scalar_lea.sflag [#allocation4], 1
    %19 = vsyncpa %s18, 0
    loop: start=0, step=1, limit=4
    $region2: #{tpu_custom_call.1} parent=1 // loop_pre_header
      _
    $region3: #{tpu_custom_call.1} parent=1 // loop_header
      %s21 = sphi 0, %s25
      %p22 = scmp.ge.s32.totalorder %s21, 4
      %s31 = sphi 0, %s33
      %s34 = sphi 0, %s31
      %s35 = sphi 0, %s34
      %s51 = sphi 0, %s35
      %s55 = sphi 0, %s55
      %s57 = sphi 0, %s55
      %s58 = sphi 0, %s57
      %s72 = sphi 0, %s58
      %s76 = sphi 0, %s76
      %s78 = sphi 0, %s76
      %s79 = sphi 0, %s78
      %s93 = sphi 0, %s79
      %s97 = sphi 0, %s97
      %s99 = sphi 0, %s97
      %s100 = sphi 0, %s99
      %s114 = sphi 0, %s100
      %s118 = sphi 0, %s118
      %s120 = sphi 0, %s118
      %s121 = sphi 0, %s120
      %s135 = sphi 0, %s121
      %s139 = sphi 0, %s139
      %s141 = sphi 0, %s139
      %s142 = sphi 0, %s141
      %s156 = sphi 0, %s142
      %s160 = sphi 0, %s160
      %s162 = sphi 0, %s160
      %s163 = sphi 0, %s162
      %s177 = sphi 0, %s163
      %s183 = sphi 0, %s185
      %s186 = sphi 0, %s183
      %s187 = sphi 0, %s186
      %s203 = sphi 0, %s187
    $region4: #{tpu_custom_call.1} parent=1 // loop_header_branch
      %24 = sbr.rel (%p22) target = $region8
    $region5: #{tpu_custom_call.1} parent=1 // loop_body
      %s26 = ssub.s32 %s21, 1
      %s27 = ssub.s32 %s21, 2
      %s28 = sadd.s32 %s21, 1
      %s29 = ssub.s32 %s21, %s28
      %p30 = scmp.eq.s32.totalorder %s29, 0
      %s32 = sadd.s32 %s31, 1
      %s33 = scalar_select %p30, %s31, %s32
      %p36 = pneg %p30
      %p37 = scmp.eq.s32.totalorder %s21, 1
      %p38 = por %p36, %p37
      %p39 = scmp.ne.s32.totalorder %s31, %s34
      %p40 = scmp.eq.s32.totalorder %s21, 0
      %p41 = por %p39, %p40
      %p42 = scmp.ne.s32.totalorder %s31, %s34
      %p43 = scmp.eq.s32.totalorder %s26, 1
      %p44 = por %p42, %p43
      %p45 = scmp.ne.s32.totalorder %s34, %s35
      %p46 = scmp.eq.s32.totalorder %s26, 0
      %p47 = por %p45, %p46
      %p48 = scmp.ne.s32.totalorder %s34, %s35
      %p49 = scmp.eq.s32.totalorder %s27, 1
      %p50 = por %p48, %p49
      %p52 = scmp.ne.s32.totalorder %s35, %s51
      %p53 = scmp.eq.s32.totalorder %s27, 0
      %p54 = por %p52, %p53
      %s56 = sadd.s32 %s55, 1
      %p59 = scmp.eq.s32.totalorder %s21, 1
      %p60 = scmp.ne.s32.totalorder %s55, %s57
      %p61 = scmp.eq.s32.totalorder %s21, 0
      %p62 = por %p60, %p61
      %p63 = scmp.ne.s32.totalorder %s55, %s57
      %p64 = scmp.eq.s32.totalorder %s26, 1
      %p65 = por %p63, %p64
      %p66 = scmp.ne.s32.totalorder %s57, %s58
      %p67 = scmp.eq.s32.totalorder %s26, 0
      %p68 = por %p66, %p67
      %p69 = scmp.ne.s32.totalorder %s57, %s58
      %p70 = scmp.eq.s32.totalorder %s27, 1
      %p71 = por %p69, %p70
      %p73 = scmp.ne.s32.totalorder %s58, %s72
      %p74 = scmp.eq.s32.totalorder %s27, 0
      %p75 = por %p73, %p74
      %s77 = sadd.s32 %s76, 1
      %p80 = scmp.eq.s32.totalorder %s21, 1
      %p81 = scmp.ne.s32.totalorder %s76, %s78
      %p82 = scmp.eq.s32.totalorder %s21, 0
      %p83 = por %p81, %p82
      %p84 = scmp.ne.s32.totalorder %s76, %s78
      %p85 = scmp.eq.s32.totalorder %s26, 1
      %p86 = por %p84, %p85
      %p87 = scmp.ne.s32.totalorder %s78, %s79
      %p88 = scmp.eq.s32.totalorder %s26, 0
      %p89 = por %p87, %p88
      %p90 = scmp.ne.s32.totalorder %s78, %s79
      %p91 = scmp.eq.s32.totalorder %s27, 1
      %p92 = por %p90, %p91
      %p94 = scmp.ne.s32.totalorder %s79, %s93
      %p95 = scmp.eq.s32.totalorder %s27, 0
      %p96 = por %p94, %p95
      %s98 = sadd.s32 %s97, 1
      %p101 = scmp.eq.s32.totalorder %s21, 1
      %p102 = scmp.ne.s32.totalorder %s97, %s99
      %p103 = scmp.eq.s32.totalorder %s21, 0
      %p104 = por %p102, %p103
      %p105 = scmp.ne.s32.totalorder %s97, %s99
      %p106 = scmp.eq.s32.totalorder %s26, 1
      %p107 = por %p105, %p106
      %p108 = scmp.ne.s32.totalorder %s99, %s100
      %p109 = scmp.eq.s32.totalorder %s26, 0
      %p110 = por %p108, %p109
      %p111 = scmp.ne.s32.totalorder %s99, %s100
      %p112 = scmp.eq.s32.totalorder %s27, 1
      %p113 = por %p111, %p112
      %p115 = scmp.ne.s32.totalorder %s100, %s114
      %p116 = scmp.eq.s32.totalorder %s27, 0
      %p117 = por %p115, %p116
      %s119 = sadd.s32 %s118, 1
      %p122 = scmp.eq.s32.totalorder %s21, 1
      %p123 = scmp.ne.s32.totalorder %s118, %s120
      %p124 = scmp.eq.s32.totalorder %s21, 0
      %p125 = por %p123, %p124
      %p126 = scmp.ne.s32.totalorder %s118, %s120
      %p127 = scmp.eq.s32.totalorder %s26, 1
      %p128 = por %p126, %p127
      %p129 = scmp.ne.s32.totalorder %s120, %s121
      %p130 = scmp.eq.s32.totalorder %s26, 0
      %p131 = por %p129, %p130
      %p132 = scmp.ne.s32.totalorder %s120, %s121
      %p133 = scmp.eq.s32.totalorder %s27, 1
      %p134 = por %p132, %p133
      %p136 = scmp.ne.s32.totalorder %s121, %s135
      %p137 = scmp.eq.s32.totalorder %s27, 0
      %p138 = por %p136, %p137
      %s140 = sadd.s32 %s139, 1
      %p143 = scmp.eq.s32.totalorder %s21, 1
      %p144 = scmp.ne.s32.totalorder %s139, %s141
      %p145 = scmp.eq.s32.totalorder %s21, 0
      %p146 = por %p144, %p145
      %p147 = scmp.ne.s32.totalorder %s139, %s141
      %p148 = scmp.eq.s32.totalorder %s26, 1
      %p149 = por %p147, %p148
      %p150 = scmp.ne.s32.totalorder %s141, %s142
      %p151 = scmp.eq.s32.totalorder %s26, 0
      %p152 = por %p150, %p151
      %p153 = scmp.ne.s32.totalorder %s141, %s142
      %p154 = scmp.eq.s32.totalorder %s27, 1
      %p155 = por %p153, %p154
      %p157 = scmp.ne.s32.totalorder %s142, %s156
      %p158 = scmp.eq.s32.totalorder %s27, 0
      %p159 = por %p157, %p158
      %s161 = sadd.s32 %s160, 1
      %p164 = scmp.eq.s32.totalorder %s21, 1
      %p165 = scmp.ne.s32.totalorder %s160, %s162
      %p166 = scmp.eq.s32.totalorder %s21, 0
      %p167 = por %p165, %p166
      %p168 = scmp.ne.s32.totalorder %s160, %s162
      %p169 = scmp.eq.s32.totalorder %s26, 1
      %p170 = por %p168, %p169
      %p171 = scmp.ne.s32.totalorder %s162, %s163
      %p172 = scmp.eq.s32.totalorder %s26, 0
      %p173 = por %p171, %p172
      %p174 = scmp.ne.s32.totalorder %s162, %s163
      %p175 = scmp.eq.s32.totalorder %s27, 1
      %p176 = por %p174, %p175
      %p178 = scmp.ne.s32.totalorder %s163, %s177
      %p179 = scmp.eq.s32.totalorder %s27, 0
      %p180 = por %p178, %p179
      %s181 = ssub.s32 %s21, %s28
      %p182 = scmp.eq.s32.totalorder %s181, 0
      %s184 = sadd.s32 %s183, 1
      %s185 = scalar_select %p182, %s183, %s184
      %p188 = pneg %p182
      %p189 = scmp.eq.s32.totalorder %s21, 1
      %p190 = por %p188, %p189
      %p191 = scmp.ne.s32.totalorder %s183, %s186
      %p192 = scmp.eq.s32.totalorder %s21, 0
      %p193 = por %p191, %p192
      %p194 = scmp.ne.s32.totalorder %s183, %s186
      %p195 = scmp.eq.s32.totalorder %s26, 1
      %p196 = por %p194, %p195
      %p197 = scmp.ne.s32.totalorder %s186, %s187
      %p198 = scmp.eq.s32.totalorder %s26, 0
      %p199 = por %p197, %p198
      %p200 = scmp.ne.s32.totalorder %s186, %s187
      %p201 = scmp.eq.s32.totalorder %s27, 1
      %p202 = por %p200, %p201
      %p204 = scmp.ne.s32.totalorder %s187, %s203
      %p205 = scmp.eq.s32.totalorder %s27, 0
      %p206 = por %p204, %p205
      %p207 = scmp.le.s32.totalorder 1, %s21
      %p208 = scmp.lt.s32.totalorder %s21, 3
      %p209 = pnand %p207, %p208
      %p210 = pneg %p209
      // Predicated region
      $region9: #{tpu_custom_call.1} parent=5 // pred_check
        _
      $region10: #{tpu_custom_call.1} parent=5 // pred_check_branch
        %212 = sbr.rel (%p209) target = $region12
      $region11: #{tpu_custom_call.1} parent=5 // pred_region
        %s213 = ssub.s32 %s21, 1
        // Predicated region
        $region13: #{tpu_custom_call.1} parent=11 // pred_check
          %p214 = pneg %p68
        $region14: #{tpu_custom_call.1} parent=11 // pred_check_branch
          %216 = sbr.rel (%p214) target = $region16
        $region15: #{tpu_custom_call.1} parent=11 // pred_region
          %218 = vsyncadd [#allocation6], 0
          %s219 = sshll.u32 %s1, 4
          %s220 = int_to_ptr.hbm [resolvable:$true] %s219
          %s221 = sshll.u32 [#allocation5], 4
          %s222 = int_to_ptr.vmem [resolvable:$true] %s221
          %227 = dma.hbm_to_vmem [thread:$0]  %s220, 2048, %s222, [#allocation6], 128, 128, 8
        $region16: #{tpu_custom_call.1} parent=11 // pred_fallthru
          _
        // Predicated region
        $region17: #{tpu_custom_call.1} parent=11 // pred_check
          %p228 = pneg %p89
        $region18: #{tpu_custom_call.1} parent=11 // pred_check_branch
          %230 = sbr.rel (%p228) target = $region20
        $region19: #{tpu_custom_call.1} parent=11 // pred_region
          _
        $region20: #{tpu_custom_call.1} parent=11 // pred_fallthru
          _
        // Predicated region
        $region21: #{tpu_custom_call.1} parent=11 // pred_check
          %p231 = pneg %p110
        $region22: #{tpu_custom_call.1} parent=11 // pred_check_branch
          %233 = sbr.rel (%p231) target = $region24
        $region23: #{tpu_custom_call.1} parent=11 // pred_region
          %235 = vsyncadd [#allocation6], 0
          %s236 = sshll.u32 %s3, 4
          %s237 = int_to_ptr.hbm [resolvable:$true] %s236
          %s238 = sshll.u32 [#allocation7], 4
          %s239 = int_to_ptr.vmem [resolvable:$true] %s238
          %244 = dma.hbm_to_vmem [thread:$0]  %s237, 512, %s239, [#allocation6], 128, 128, 8
        $region24: #{tpu_custom_call.1} parent=11 // pred_fallthru
          _
        // Predicated region
        $region25: #{tpu_custom_call.1} parent=11 // pred_check
          %p245 = pneg %p131
        $region26: #{tpu_custom_call.1} parent=11 // pred_check_branch
          %247 = sbr.rel (%p245) target = $region28
        $region27: #{tpu_custom_call.1} parent=11 // pred_region
          _
        $region28: #{tpu_custom_call.1} parent=11 // pred_fallthru
          _
        // Predicated region
        $region29: #{tpu_custom_call.1} parent=11 // pred_check
          %p248 = pneg %p152
        $region30: #{tpu_custom_call.1} parent=11 // pred_check_branch
          %250 = sbr.rel (%p248) target = $region32
        $region31: #{tpu_custom_call.1} parent=11 // pred_region
          %252 = vsyncadd [#allocation9], 0
          %s253 = sshll.u32 %s5, 4
          %s254 = int_to_ptr.hbm [resolvable:$true] %s253
          %s255 = sshll.u32 [#allocation8], 4
          %s256 = int_to_ptr.vmem [resolvable:$true] %s255
          %261 = dma.hbm_to_vmem [thread:$0]  %s254, 256, %s256, [#allocation9], 128, 128, 8
        $region32: #{tpu_custom_call.1} parent=11 // pred_fallthru
          _
        // Predicated region
        $region33: #{tpu_custom_call.1} parent=11 // pred_check
          %p262 = pneg %p173
        $region34: #{tpu_custom_call.1} parent=11 // pred_check_branch
          %264 = sbr.rel (%p262) target = $region36
        $region35: #{tpu_custom_call.1} parent=11 // pred_region
          _
        $region36: #{tpu_custom_call.1} parent=11 // pred_fallthru
          _
      $region12: #{tpu_custom_call.1} parent=5 // pred_fallthru
        _
      %p265 = scmp.lt.s32.totalorder %s21, 2
      // Predicated region
      $region37: #{tpu_custom_call.1} parent=5 // pred_check
        %p266 = pneg %p265
      $region38: #{tpu_custom_call.1} parent=5 // pred_check_branch
        %268 = sbr.rel (%p266) target = $region40
      $region39: #{tpu_custom_call.1} parent=5 // pred_region
        // Predicated region
        $region41: #{tpu_custom_call.1} parent=39 // pred_check
          %p269 = pneg %p41
        $region42: #{tpu_custom_call.1} parent=39 // pred_check_branch
          %271 = sbr.rel (%p269) target = $region44
        $region43: #{tpu_custom_call.1} parent=39 // pred_region
          %s272 = sand.u32 %s31, 1
          %s273 = scalar_lea.sflag [#allocation3], %s272
          %s274 = sand.u32 %s31, 1
          %s275 = smul.addr %s274, 32
          %s276 = scalar_lea.vmem [#allocation2], %s275
          %s277 = smul.u32 4, %s21
          %279 = vsyncadd %s273, 0
          %s280 = smul.addr %s277, 8
          %s281 = scalar_lea.hbm %s0, %s280
          %s282 = sshll.u32 %s281, 4
          %s283 = int_to_ptr.hbm [resolvable:$true] %s282
          %s284 = sshll.u32 %s276, 4
          %s285 = int_to_ptr.vmem [resolvable:$true] %s284
          %290 = dma.hbm_to_vmem [thread:$0]  %s283, 512, %s285, %s273, 128, 128, 8
        $region44: #{tpu_custom_call.1} parent=39 // pred_fallthru
          _
      $region40: #{tpu_custom_call.1} parent=5 // pred_fallthru
        _
      %p291 = scmp.le.s32.totalorder 1, %s21
      %p292 = scmp.lt.s32.totalorder %s21, 3
      %p293 = pnand %p291, %p292
      %p294 = pneg %p293
      // Predicated region
      $region45: #{tpu_custom_call.1} parent=5 // pred_check
        _
      $region46: #{tpu_custom_call.1} parent=5 // pred_check_branch
        %296 = sbr.rel (%p293) target = $region48
      $region47: #{tpu_custom_call.1} parent=5 // pred_region
        %s297 = ssub.s32 %s21, 1
        %s298 = sand.u32 %s34, 1
        %s299 = scalar_lea.sflag [#allocation3], %s298
        %s300 = sand.u32 %s34, 1
        %s301 = smul.addr %s300, 32
        %s302 = scalar_lea.vmem [#allocation2], %s301
        // Predicated region
        $region49: #{tpu_custom_call.1} parent=47 // pred_check
          %p303 = pneg %p47
        $region50: #{tpu_custom_call.1} parent=47 // pred_check_branch
          %305 = sbr.rel (%p303) target = $region52
        $region51: #{tpu_custom_call.1} parent=47 // pred_region
          %307 = dma.done %s299, 512
        $region52: #{tpu_custom_call.1} parent=47 // pred_fallthru
          _
        // Predicated region
        $region53: #{tpu_custom_call.1} parent=47 // pred_check
          %p308 = pneg %p68
        $region54: #{tpu_custom_call.1} parent=47 // pred_check_branch
          %310 = sbr.rel (%p308) target = $region56
        $region55: #{tpu_custom_call.1} parent=47 // pred_region
          %312 = dma.done [#allocation6], 2048
        $region56: #{tpu_custom_call.1} parent=47 // pred_fallthru
          _
        // Predicated region
        $region57: #{tpu_custom_call.1} parent=47 // pred_check
          %p313 = pneg %p110
        $region58: #{tpu_custom_call.1} parent=47 // pred_check_branch
          %315 = sbr.rel (%p313) target = $region60
        $region59: #{tpu_custom_call.1} parent=47 // pred_region
          %317 = dma.done [#allocation6], 512
        $region60: #{tpu_custom_call.1} parent=47 // pred_fallthru
          _
        // Predicated region
        $region61: #{tpu_custom_call.1} parent=47 // pred_check
          %p318 = pneg %p152
        $region62: #{tpu_custom_call.1} parent=47 // pred_check_branch
          %320 = sbr.rel (%p318) target = $region64
        $region63: #{tpu_custom_call.1} parent=47 // pred_region
          %322 = dma.done [#allocation9], 256
        $region64: #{tpu_custom_call.1} parent=47 // pred_fallthru
          _
        %s323 = sand.u32 %s34, 1
        %s324 = scalar_lea.sflag [#allocation3], %s323
        %s325 = sand.u32 %s34, 1
        %s326 = smul.addr %s325, 32
        %s327 = scalar_lea.vmem [#allocation2], %s326
        %p328 = pneg %p47
        %p329 = pneg %p44
        %p330 = pneg %p68
        %p331 = pneg %p65
        %p332 = pneg %p89
        %p333 = pneg %p86
        %p334 = pneg %p110
        %p335 = pneg %p107
        %p336 = pneg %p131
        %p337 = pneg %p128
        %p338 = pneg %p152
        %p339 = pneg %p149
        %p340 = pneg %p173
        %p341 = pneg %p170
        %p342 = pneg %p199
        %p343 = pneg %p196
        %s344 = sand.u32 %s186, 1
        %s345 = scalar_lea.sflag [#allocation4], %s344
        %s346 = sand.u32 %s186, 1
        %s347 = smul.addr %s346, 32
        %s348 = scalar_lea.vmem [#allocation10], %s347
        %s349 = smul.u32 4, %s26
        %s350 = smul.u32 4, %s26
        %v351 = vld [vmem:[%s302] sm:$0xff]
        %v352 = vld [vmem:[%s302 + $0x8] sm:$0xff]
        %v353 = vld [vmem:[%s302 + $0x10] sm:$0xff]
        %v354 = vld [vmem:[%s302 + $0x18] sm:$0xff]
        %v355 = vld [vmem:[#allocation5] sm:$0xff]
        %v356 = vld [vmem:[#allocation5 + $0x8] sm:$0xff]
        %v357 = vld [vmem:[#allocation5 + $0x10] sm:$0xff]
        %v358 = vld [vmem:[#allocation5 + $0x18] sm:$0xff]
        %v359 = vld [vmem:[#allocation5 + $0x20] sm:$0xff]
        %v360 = vld [vmem:[#allocation5 + $0x28] sm:$0xff]
        %v361 = vld [vmem:[#allocation5 + $0x30] sm:$0xff]
        %v362 = vld [vmem:[#allocation5 + $0x38] sm:$0xff]
        %v363 = vld [vmem:[#allocation5 + $0x40] sm:$0xff]
        %v364 = vld [vmem:[#allocation5 + $0x48] sm:$0xff]
        %v365 = vld [vmem:[#allocation5 + $0x50] sm:$0xff]
        %v366 = vld [vmem:[#allocation5 + $0x58] sm:$0xff]
        %v367 = vld [vmem:[#allocation5 + $0x60] sm:$0xff]
        %v368 = vld [vmem:[#allocation5 + $0x68] sm:$0xff]
        %v369 = vld [vmem:[#allocation5 + $0x70] sm:$0xff]
        %v370 = vld [vmem:[#allocation5 + $0x78] sm:$0xff]
        %v371 = vld [vmem:[%s2] sm:$0x1]
        %v373 = vperm.slane %v371, 0
        %375 = vmatpush.msra.mxu0 %v370
        %376 = vmatpush.msra.mxu0 %v369
        %377 = vmatpush.msra.mxu0 %v368
        %378 = vmatpush.msra.mxu0 %v367
        %379 = vmatpush.msra.mxu0 %v366
        %380 = vmatpush.msra.mxu0 %v365
        %381 = vmatpush.msra.mxu0 %v364
        %382 = vmatpush.msra.mxu0 %v363
        %383 = vmatpush.msra.mxu0 %v362
        %384 = vmatpush.msra.mxu0 %v361
        %385 = vmatpush.msra.mxu0 %v360
        %386 = vmatpush.msra.mxu0 %v359
        %387 = vmatpush.msra.mxu0 %v358
        %388 = vmatpush.msra.mxu0 %v357
        %389 = vmatpush.msra.mxu0 %v356
        %390 = vmatpush.msra.mxu0 %v355
        %391 = vmatmul.f32.gmra.mxu0 %v351
        %v392 = vpop.f32.mrf.mxu0
        %v393 = vadd.f32 %v373, %v392
        %394 = vmatmul.f32.gmra.mxu0 %v352
        %v395 = vpop.f32.mrf.mxu0
        %v396 = vadd.f32 %v373, %v395
        %397 = vmatmul.f32.gmra.mxu0 %v353
        %v398 = vpop.f32.mrf.mxu0
        %v399 = vadd.f32 %v373, %v398
        %400 = vmatmul.f32.gmra.mxu0 %v354
        %v401 = vpop.f32.mrf.mxu0
        %v402 = vadd.f32 %v373, %v401
        %403 = vdwg.mxu0
        %408 = vrot.lane.b32.xlu0 %v393, 96
        %v409 = vpop.permute.xlu0 %408
        %410 = vrot.lane.b32.xlu0 %v396, 96
        %v411 = vpop.permute.xlu0 %410
        %412 = vrot.lane.b32.xlu0 %v399, 96
        %v413 = vpop.permute.xlu0 %412
        %414 = vrot.lane.b32.xlu0 %v402, 96
        %v415 = vpop.permute.xlu0 %414
        %v420 = vmax.f32 %v393, %v409
        %v421 = vmax.f32 %v396, %v411
        %v422 = vmax.f32 %v399, %v413
        %v423 = vmax.f32 %v402, %v415
        %424 = vrot.lane.b32.xlu0 %v393, 64
        %v425 = vpop.permute.xlu0 %424
        %426 = vrot.lane.b32.xlu0 %v396, 64
        %v427 = vpop.permute.xlu0 %426
        %428 = vrot.lane.b32.xlu0 %v399, 64
        %v429 = vpop.permute.xlu0 %428
        %430 = vrot.lane.b32.xlu0 %v402, 64
        %v431 = vpop.permute.xlu0 %430
        %v436 = vmax.f32 %v420, %v425
        %v437 = vmax.f32 %v421, %v427
        %v438 = vmax.f32 %v422, %v429
        %v439 = vmax.f32 %v423, %v431
        %440 = vrot.lane.b32.xlu0 %v393, 32
        %v441 = vpop.permute.xlu0 %440
        %442 = vrot.lane.b32.xlu0 %v396, 32
        %v443 = vpop.permute.xlu0 %442
        %444 = vrot.lane.b32.xlu0 %v399, 32
        %v445 = vpop.permute.xlu0 %444
        %446 = vrot.lane.b32.xlu0 %v402, 32
        %v447 = vpop.permute.xlu0 %446
        %v452 = vmax.f32 %v436, %v441
        %v453 = vmax.f32 %v437, %v443
        %v454 = vmax.f32 %v438, %v445
        %v455 = vmax.f32 %v439, %v447
        %v456 = vld [vmem:[#allocation7] sm:$0xff]
        %v457 = vld [vmem:[#allocation7 + $0x8] sm:$0xff]
        %v458 = vld [vmem:[#allocation7 + $0x10] sm:$0xff]
        %v459 = vld [vmem:[#allocation7 + $0x18] sm:$0xff]
        %v460 = vld [vmem:[%s4] sm:$0x1]
        %v462 = vperm.slane %v460, 0
        %vm464 = vcmask 261120
        %v466 = vsel %vm464, %v452, 0
        %v469 = vsel %vm464, %v453, 0
        %v472 = vsel %vm464, %v454, 0
        %v475 = vsel %vm464, %v455, 0
        %477 = vmatpush.msra.mxu0 0.0
        %478 = vmatpush.msra.mxu0 0.0
        %479 = vmatpush.msra.mxu0 0.0
        %480 = vmatpush.msra.mxu0 0.0
        %481 = vmatpush.msra.mxu0 0.0
        %482 = vmatpush.msra.mxu0 0.0
        %483 = vmatpush.msra.mxu0 0.0
        %484 = vmatpush.msra.mxu0 0.0
        %485 = vmatpush.msra.mxu0 0.0
        %486 = vmatpush.msra.mxu0 0.0
        %487 = vmatpush.msra.mxu0 0.0
        %488 = vmatpush.msra.mxu0 0.0
        %489 = vmatpush.msra.mxu0 %v459
        %490 = vmatpush.msra.mxu0 %v458
        %491 = vmatpush.msra.mxu0 %v457
        %492 = vmatpush.msra.mxu0 %v456
        %493 = vmatmul.f32.gmra.mxu0 %v466
        %v494 = vpop.f32.mrf.mxu0
        %v495 = vadd.f32 %v462, %v494
        %496 = vmatmul.f32.gmra.mxu0 %v469
        %v497 = vpop.f32.mrf.mxu0
        %v498 = vadd.f32 %v462, %v497
        %499 = vmatmul.f32.gmra.mxu0 %v472
        %v500 = vpop.f32.mrf.mxu0
        %v501 = vadd.f32 %v462, %v500
        %502 = vmatmul.f32.gmra.mxu0 %v475
        %v503 = vpop.f32.mrf.mxu0
        %v504 = vadd.f32 %v462, %v503
        %505 = vdwg.mxu0
        %510 = vrot.lane.b32.xlu0 %v495, 112
        %v511 = vpop.permute.xlu0 %510
        %512 = vrot.lane.b32.xlu0 %v498, 112
        %v513 = vpop.permute.xlu0 %512
        %514 = vrot.lane.b32.xlu0 %v501, 112
        %v515 = vpop.permute.xlu0 %514
        %516 = vrot.lane.b32.xlu0 %v504, 112
        %v517 = vpop.permute.xlu0 %516
        %v522 = vmax.f32 %v495, %v511
        %v523 = vmax.f32 %v498, %v513
        %v524 = vmax.f32 %v501, %v515
        %v525 = vmax.f32 %v504, %v517
        %526 = vrot.lane.b32.xlu0 %v495, 96
        %v527 = vpop.permute.xlu0 %526
        %528 = vrot.lane.b32.xlu0 %v498, 96
        %v529 = vpop.permute.xlu0 %528
        %530 = vrot.lane.b32.xlu0 %v501, 96
        %v531 = vpop.permute.xlu0 %530
        %532 = vrot.lane.b32.xlu0 %v504, 96
        %v533 = vpop.permute.xlu0 %532
        %v538 = vmax.f32 %v522, %v527
        %v539 = vmax.f32 %v523, %v529
        %v540 = vmax.f32 %v524, %v531
        %v541 = vmax.f32 %v525, %v533
        %542 = vrot.lane.b32.xlu0 %v495, 80
        %v543 = vpop.permute.xlu0 %542
        %544 = vrot.lane.b32.xlu0 %v498, 80
        %v545 = vpop.permute.xlu0 %544
        %546 = vrot.lane.b32.xlu0 %v501, 80
        %v547 = vpop.permute.xlu0 %546
        %548 = vrot.lane.b32.xlu0 %v504, 80
        %v549 = vpop.permute.xlu0 %548
        %v554 = vmax.f32 %v538, %v543
        %v555 = vmax.f32 %v539, %v545
        %v556 = vmax.f32 %v540, %v547
        %v557 = vmax.f32 %v541, %v549
        %v558 = vld [vmem:[#allocation8] sm:$0xff]
        %v559 = vld [vmem:[#allocation8 + $0x8] sm:$0xff]
        %v560 = vld [vmem:[%s6] sm:$0x1]
        %v562 = vperm.slane %v560, 0
        %vm564 = vcmask 130048
        %v566 = vsel %vm564, %v554, 0
        %v569 = vsel %vm564, %v555, 0
        %v572 = vsel %vm564, %v556, 0
        %v575 = vsel %vm564, %v557, 0
        %577 = vmatpush.msra.mxu0 0.0
        %578 = vmatpush.msra.mxu0 0.0
        %579 = vmatpush.msra.mxu0 0.0
        %580 = vmatpush.msra.mxu0 0.0
        %581 = vmatpush.msra.mxu0 0.0
        %582 = vmatpush.msra.mxu0 0.0
        %583 = vmatpush.msra.mxu0 0.0
        %584 = vmatpush.msra.mxu0 0.0
        %585 = vmatpush.msra.mxu0 0.0
        %586 = vmatpush.msra.mxu0 0.0
        %587 = vmatpush.msra.mxu0 0.0
        %588 = vmatpush.msra.mxu0 0.0
        %589 = vmatpush.msra.mxu0 0.0
        %590 = vmatpush.msra.mxu0 0.0
        %591 = vmatpush.msra.mxu0 %v559
        %592 = vmatpush.msra.mxu0 %v558
        %593 = vmatmul.f32.gmra.mxu0 %v566
        %v594 = vpop.f32.mrf.mxu0
        %v595 = vadd.f32 %v562, %v594
        %596 = vmatmul.f32.gmra.mxu0 %v569
        %v597 = vpop.f32.mrf.mxu0
        %v598 = vadd.f32 %v562, %v597
        %599 = vmatmul.f32.gmra.mxu0 %v572
        %v600 = vpop.f32.mrf.mxu0
        %v601 = vadd.f32 %v562, %v600
        %602 = vmatmul.f32.gmra.mxu0 %v575
        %v603 = vpop.f32.mrf.mxu0
        %v604 = vadd.f32 %v562, %v603
        %605 = vdwg.mxu0
        %v606 = vsub.f32 0.0, %v595
        %v607 = vsub.f32 0.0, %v598
        %v608 = vsub.f32 0.0, %v601
        %v609 = vsub.f32 0.0, %v604
        %v610 = vmul.f32 %v606, 1.442695
        %v611 = vpow.pop %v610
        %v612 = vmul.f32 %v607, 1.442695
        %v613 = vpow.pop %v612
        %v614 = vmul.f32 %v608, 1.442695
        %v615 = vpow.pop %v614
        %v616 = vmul.f32 %v609, 1.442695
        %v617 = vpow.pop %v616
        %v618 = vadd.f32 %v611, 1.0
        %v619 = vadd.f32 %v613, 1.0
        %v620 = vadd.f32 %v615, 1.0
        %v621 = vadd.f32 %v617, 1.0
        %v622 = vrcp.pop %v618
        %v623 = vrcp.pop %v619
        %v624 = vrcp.pop %v620
        %v625 = vrcp.pop %v621
        %626 = vst [vmem:[%s348] sm:$0xff] %v622
        %627 = vst [vmem:[%s348 + $0x8] sm:$0xff] %v623
        %628 = vst [vmem:[%s348 + $0x10] sm:$0xff] %v624
        %629 = vst [vmem:[%s348 + $0x18] sm:$0xff] %v625
        %s630 = sand.u32 %s186, 1
        %s631 = scalar_lea.sflag [#allocation4], %s630
        %s632 = sand.u32 %s186, 1
        %s633 = smul.addr %s632, 32
        %s634 = scalar_lea.vmem [#allocation10], %s633
        // Predicated region
        $region65: #{tpu_custom_call.1} parent=47 // pred_check
          %p635 = pneg %p196
        $region66: #{tpu_custom_call.1} parent=47 // pred_check_branch
          %637 = sbr.rel (%p635) target = $region68
        $region67: #{tpu_custom_call.1} parent=47 // pred_region
          %s638 = smul.u32 4, %s26
          %640 = vsyncadd %s631, 0
          %s641 = smul.addr %s638, 8
          %s642 = scalar_lea.hbm %s7, %s641
          %s643 = sshll.u32 %s634, 4
          %s644 = int_to_ptr.vmem [resolvable:$true] %s643
          %s645 = sshll.u32 %s642, 4
          %s646 = int_to_ptr.hbm [resolvable:$true] %s645
          %651 = dma.vmem_to_hbm [thread:$0]  %s644, 512, %s646, %s631, 128, 128, 8
        $region68: #{tpu_custom_call.1} parent=47 // pred_fallthru
          _
      $region48: #{tpu_custom_call.1} parent=5 // pred_fallthru
        _
      %p652 = scmp.le.s32.totalorder 2, %s21
      // Predicated region
      $region69: #{tpu_custom_call.1} parent=5 // pred_check
        %p653 = pneg %p652
      $region70: #{tpu_custom_call.1} parent=5 // pred_check_branch
        %655 = sbr.rel (%p653) target = $region72
      $region71: #{tpu_custom_call.1} parent=5 // pred_region
        %s656 = ssub.s32 %s21, 2
        // Predicated region
        $region73: #{tpu_custom_call.1} parent=71 // pred_check
          %p657 = pneg %p202
        $region74: #{tpu_custom_call.1} parent=71 // pred_check_branch
          %659 = sbr.rel (%p657) target = $region76
        $region75: #{tpu_custom_call.1} parent=71 // pred_region
          %s660 = sand.u32 %s187, 1
          %s661 = scalar_lea.sflag [#allocation4], %s660
          %s662 = sand.u32 %s187, 1
          %s663 = smul.addr %s662, 32
          %s664 = scalar_lea.vmem [#allocation10], %s663
          %666 = dma.done %s661, 512
        $region76: #{tpu_custom_call.1} parent=71 // pred_fallthru
          _
      $region72: #{tpu_custom_call.1} parent=5 // pred_fallthru
        _
    $region6: #{tpu_custom_call.1} parent=1 // loop_footer
      %s25 = sadd.s32 1, %s21
    $region7: #{tpu_custom_call.1} parent=1 // loop_footer_branch
      %20 = sbr.rel target = $region3
    $region8: #{tpu_custom_call.1} parent=1 // loop_exit
      _
    %667 = vsyncpa [#allocation3], 1
    %s668 = scalar_lea.sflag [#allocation3], 1
    %669 = vsyncpa %s668, 1
    %670 = vsyncpa [#allocation6], 1
    %671 = vsyncpa [#allocation9], 1
    %672 = vsyncpa [#allocation4], 1
    %s673 = scalar_lea.sflag [#allocation4], 1
    %674 = vsyncpa %s673, 1

</llo_original>
